<compile_context>
chip_gen: v7x
topology: tpu7x:2x2x1
jax: 0.10.0
libtpu: 0.0.40
codegen_flags: <defaults>
</compile_context>

<pallas_src>
import jax
import jax.numpy as jnp
from jax import lax
from jax.experimental import pallas as pl
from jax.experimental.pallas import tpu as pltpu


def skipgram_nll_kernel(cw_ref, tw_ref, emb_v_ref, emb_u_t_ref, out_ref,
                        center_scratch, m_scratch, denom_scratch, tgt_scratch):
    # cw_ref, tw_ref : VMEM i32 [B, 1]   (resident; block index constant)
    # emb_v_ref      : VMEM f32 [V, E]   (resident; block index constant)
    # emb_u_t_ref    : VMEM f32 [E, TV]  (streamed tile of emb_u^T)
    # out_ref        : VMEM f32 [1, 1]
    # center_scratch : VMEM f32 [B, E];  m/denom/tgt scratch: VMEM f32 [B, 1]
    k = pl.program_id(0)
    n_k = pl.num_programs(0)
    B = cw_ref.shape[0]
    V = emb_v_ref.shape[0]
    E, TV = emb_u_t_ref.shape

    @pl.when(k == 0)
    def _init():
        # Fused center-embedding gather as a single MXU matmul:
        #   center = one_hot(cw, V) @ emb_v        [B, V] @ [V, E] -> [B, E]
        cw = cw_ref[...]                                            # [B, 1] i32
        one_hot = (lax.broadcasted_iota(jnp.int32, (B, V), 1) == cw)
        center_scratch[...] = jnp.dot(one_hot.astype(jnp.float32),
                                      emb_v_ref[...],
                                      preferred_element_type=jnp.float32)
        m_scratch[...] = jnp.full_like(m_scratch, -jnp.inf)
        denom_scratch[...] = jnp.zeros_like(denom_scratch)
        tgt_scratch[...] = jnp.zeros_like(tgt_scratch)

    center = center_scratch[...]                                    # [B, E]

    # Normalizer score tile on the MXU: [B, E] @ [E, TV] -> [B, TV].
    norm_tile = jnp.dot(center, emb_u_t_ref[...],
                        preferred_element_type=jnp.float32)         # [B, TV]

    # Global column indices covered by this tile; mask ragged-edge padding.
    col = k * TV + lax.broadcasted_iota(jnp.int32, (B, TV), 1)      # [B, TV]
    norm_tile = jnp.where(col < V, norm_tile, -jnp.inf)

    # Positive score: scores[b] = norm_scores[b, tw[b]] — pulled straight out
    # of the score tile with a one-hot column mask (no Emb_u[target] gather).
    tw = tw_ref[...]                                                # [B, 1] i32
    tgt_scratch[...] += jnp.sum(jnp.where(col == tw, norm_tile, 0.0),
                                axis=1, keepdims=True)

    # Online (streaming, max-rescaled) logsumexp over the V axis.
    m_old = m_scratch[...]
    m_new = jnp.maximum(m_old, jnp.max(norm_tile, axis=1, keepdims=True))
    denom_scratch[...] = (denom_scratch[...] * jnp.exp(m_old - m_new)
                          + jnp.sum(jnp.exp(norm_tile - m_new),
                                    axis=1, keepdims=True))
    m_scratch[...] = m_new

    @pl.when(k == n_k - 1)
    def _finalize():
        # per_example = scores - logsumexp(norm_scores)  (stable form of the
        # reference log(exp(scores)/sum(exp(norm_scores)))).
        per_example = (tgt_scratch[...] - m_scratch[...]
                       - jnp.log(denom_scratch[...]))               # [B, 1]
        nll = -jnp.sum(per_example) / jnp.float32(B)
        out_ref[...] = jnp.reshape(nll, (1, 1))


def _choose_tile_v(V, tile_v):
    tv = min(tile_v, V)
    if V > 128:
        # Lane-dense tiles: multiples of 128 (and, at the default 512, of 256
        # for the v6e/v7x MXU). If V <= 128 the full-dim block is legal as-is.
        tv = max(128, (tv // 128) * 128)
    return tv


def skipgram_forward(emb_v, emb_u, center_words, target_words, all_vocabs,
                     *, tile_v=512):
    """emb_v, emb_u: [V, E] f32; center/target_words: [B, 1] i32; all_vocabs: [B, V] i32.

    all_vocabs is assumed to be arange(V) broadcast per batch row (as in the
    reference word2vec training loop), so the full-vocab normalizer equals
    center @ emb_u^T and the [B, V, E] gather never needs to exist.
    """
    del all_vocabs  # full-vocab normalizer computed directly from emb_u
    V, E = emb_v.shape
    cw = center_words.reshape(-1, 1).astype(jnp.int32)
    tw = target_words.reshape(-1, 1).astype(jnp.int32)
    B = cw.shape[0]

    # Transpose emb_u once outside the kernel (parameter-layout cost) so the
    # streamed tiles are [E, TV] and the contraction is a plain (1, 0) dot.
    emb_u_t = jnp.transpose(emb_u)                                   # [E, V]

    TV = _choose_tile_v(V, tile_v)
    grid = (pl.cdiv(V, TV),)

    out = pl.pallas_call(
        skipgram_nll_kernel,
        out_shape=jax.ShapeDtypeStruct((1, 1), jnp.float32),
        grid_spec=pltpu.PrefetchScalarGridSpec(
            num_scalar_prefetch=0,
            grid=grid,
            in_specs=[
                pl.BlockSpec((B, 1), lambda k: (0, 0)),   # center word idx
                pl.BlockSpec((B, 1), lambda k: (0, 0)),   # target word idx
                pl.BlockSpec((V, E), lambda k: (0, 0)),   # emb_v (resident)
                pl.BlockSpec((E, TV), lambda k: (0, k)),  # emb_u^T (streamed)
            ],
            out_specs=pl.BlockSpec((1, 1), lambda k: (0, 0)),
            scratch_shapes=[
                pltpu.VMEM((B, E), jnp.float32),   # gathered center embeds
                pltpu.VMEM((B, 1), jnp.float32),   # running max m
                pltpu.VMEM((B, 1), jnp.float32),   # running denom
                pltpu.VMEM((B, 1), jnp.float32),   # positive (target) score
            ],
        ),
        compiler_params=pltpu.CompilerParams(
            # V axis carries the logsumexp accumulators -> "arbitrary".
            dimension_semantics=("arbitrary",),
            # Raised scoped VMEM (v5e default is 16 MiB); 32 MiB stays safely
            # under v7x's 64 MiB physical VMEM. Re-derive TV for v7x rather
            # than copying a 128 MiB-tuned tile.
            vmem_limit_bytes=32 * 1024 * 1024,
        ),
    )(cw, tw, emb_v, emb_u_t)
    return out[0, 0]


if __name__ == "__main__":
    VOCAB, EMB, BATCH = 512, 32, 8
    TILE_V = 128   # small tile to exercise the multi-tile streaming path

    key = jax.random.PRNGKey(0)
    k_v, k_u, k_c, k_t = jax.random.split(key, 4)

    # torch.nn.Embedding default init: N(0, 1)
    emb_v = jax.random.normal(k_v, (VOCAB, EMB), dtype=jnp.float32)
    emb_u = jax.random.normal(k_u, (VOCAB, EMB), dtype=jnp.float32)

    center_words = jax.random.randint(k_c, (BATCH, 1), 0, VOCAB, dtype=jnp.int32)
    target_words = jax.random.randint(k_t, (BATCH, 1), 0, VOCAB, dtype=jnp.int32)
    all_vocabs = jnp.broadcast_to(
        jnp.arange(VOCAB, dtype=jnp.int32), (BATCH, VOCAB)
    )

    nll = skipgram_forward(emb_v, emb_u, center_words, target_words, all_vocabs,
                           tile_v=TILE_V)
    jax.block_until_ready(nll)

    # Pure-JAX reference of the exact torch math (gather + bmm + exp/sum/log).
    ce = jnp.take(emb_v, center_words[:, 0], axis=0)
    te = jnp.take(emb_u, target_words[:, 0], axis=0)
    ae = jnp.take(emb_u, all_vocabs, axis=0)
    ref_scores = jnp.sum(te * ce, axis=-1, keepdims=True)
    ref_norm = jnp.einsum("bve,be->bv", ae, ce)
    ref_nll = -jnp.mean(
        jnp.log(jnp.exp(ref_scores) / jnp.sum(jnp.exp(ref_norm), axis=1, keepdims=True))
    )
    # Tolerance covers f32 MXU multi-pass vs XLA einsum rounding differences.
    assert jnp.allclose(nll, ref_nll, rtol=1e-4, atol=1e-4), (nll, ref_nll)

    print("KERNEL_OK")
</pallas_src>

<mosaic_0001>
module attributes {stable_mosaic.version = 11 : i64} {
  func.func @skipgram_nll_kernel(%arg0: i32, %arg1: memref<8x1xi32, #tpu.memory_space<vmem>>, %arg2: memref<8x1xi32, #tpu.memory_space<vmem>>, %arg3: memref<512x32xf32, #tpu.memory_space<vmem>>, %arg4: memref<32x128xf32, #tpu.memory_space<vmem>>, %arg5: memref<1x1xf32, #tpu.memory_space<vmem>>, %arg6: memref<8x32xf32, #tpu.memory_space<vmem>>, %arg7: memref<8x1xf32, #tpu.memory_space<vmem>>, %arg8: memref<8x1xf32, #tpu.memory_space<vmem>>, %arg9: memref<8x1xf32, #tpu.memory_space<vmem>>) attributes {dimension_semantics = [#tpu.dimension_semantics<arbitrary>], iteration_bounds = array<i64: 4>, scalar_prefetch = 0 : i64, scratch_operands = 4 : i64, tpu.core_type = #tpu.core_type<tc>, window_params = [{pipeline_mode = #tpu.pipeline_mode<synchronous>, transform_indices = @transform_0, window_bounds = array<i64: 8, 1>}, {pipeline_mode = #tpu.pipeline_mode<synchronous>, transform_indices = @transform_1, window_bounds = array<i64: 8, 1>}, {pipeline_mode = #tpu.pipeline_mode<synchronous>, transform_indices = @transform_2, window_bounds = array<i64: 512, 32>}, {transform_indices = @transform_3, window_bounds = array<i64: 32, 128>}, {pipeline_mode = #tpu.pipeline_mode<synchronous>, transform_indices = @transform_4, window_bounds = array<i64: 1, 1>}]} {
    %c0_i32 = arith.constant 0 : i32
    %0 = arith.cmpi eq, %arg0, %c0_i32 : i32
    %1 = arith.extui %0 : i1 to i32
    %c0_i32_0 = arith.constant 0 : i32
    %2 = arith.cmpi ne, %1, %c0_i32_0 : i32
    scf.if %2 {
      %c0_24 = arith.constant 0 : index
      %c0_25 = arith.constant 0 : index
      %43 = vector.load %arg1[%c0_24, %c0_25] : memref<8x1xi32, #tpu.memory_space<vmem>>, vector<8x1xi32>
      %44 = tpu.iota {dimensions = array<i32: 1>} : vector<8x512xi32>
      %45 = vector.broadcast %43 : vector<8x1xi32> to vector<8x512xi32>
      %46 = arith.cmpi eq, %44, %45 : vector<8x512xi32>
      %47 = arith.extui %46 : vector<8x512xi1> to vector<8x512xi32>
      %48 = arith.sitofp %47 : vector<8x512xi32> to vector<8x512xf32>
      %c0_26 = arith.constant 0 : index
      %c0_27 = arith.constant 0 : index
      %49 = vector.load %arg3[%c0_26, %c0_27] : memref<512x32xf32, #tpu.memory_space<vmem>>, vector<512x32xf32>
      %cst_28 = arith.constant dense<0.000000e+00> : vector<8x32xf32>
      %50 = tpu.matmul %48, %49, %cst_28 {dimension_numbers = #tpu.dot_dimension_numbers<[1], [0], [0], [1], [0, 0, 1, 1], [], []>} : vector<8x512xf32>, vector<512x32xf32>, vector<8x32xf32> -> vector<8x32xf32>
      %c0_29 = arith.constant 0 : index
      %c0_30 = arith.constant 0 : index
      %51 = vector.load %arg6[%c0_29, %c0_30] : memref<8x32xf32, #tpu.memory_space<vmem>>, vector<8x32xf32>
      tpu.vector_store %arg6[%c0_29, %c0_30], %50 {strides = array<i32>} : memref<8x32xf32, #tpu.memory_space<vmem>>, vector<8x32xf32>,
      %cst_31 = arith.constant 0xFF800000 : f32
      %52 = vector.broadcast %cst_31 : f32 to vector<8x1xf32>
      %c0_32 = arith.constant 0 : index
      %c0_33 = arith.constant 0 : index
      %53 = vector.load %arg7[%c0_32, %c0_33] : memref<8x1xf32, #tpu.memory_space<vmem>>, vector<8x1xf32>
      tpu.vector_store %arg7[%c0_32, %c0_33], %52 {strides = array<i32>} : memref<8x1xf32, #tpu.memory_space<vmem>>, vector<8x1xf32>,
      %cst_34 = arith.constant 0.000000e+00 : f32
      %54 = vector.broadcast %cst_34 : f32 to vector<8x1xf32>
      %c0_35 = arith.constant 0 : index
      %c0_36 = arith.constant 0 : index
      %55 = vector.load %arg8[%c0_35, %c0_36] : memref<8x1xf32, #tpu.memory_space<vmem>>, vector<8x1xf32>
      tpu.vector_store %arg8[%c0_35, %c0_36], %54 {strides = array<i32>} : memref<8x1xf32, #tpu.memory_space<vmem>>, vector<8x1xf32>,
      %cst_37 = arith.constant 0.000000e+00 : f32
      %56 = vector.broadcast %cst_37 : f32 to vector<8x1xf32>
      %c0_38 = arith.constant 0 : index
      %c0_39 = arith.constant 0 : index
      %57 = vector.load %arg9[%c0_38, %c0_39] : memref<8x1xf32, #tpu.memory_space<vmem>>, vector<8x1xf32>
      tpu.vector_store %arg9[%c0_38, %c0_39], %56 {strides = array<i32>} : memref<8x1xf32, #tpu.memory_space<vmem>>, vector<8x1xf32>,
    } else {
    }
    %c0 = arith.constant 0 : index
    %c0_1 = arith.constant 0 : index
    %3 = vector.load %arg6[%c0, %c0_1] : memref<8x32xf32, #tpu.memory_space<vmem>>, vector<8x32xf32>
    %c0_2 = arith.constant 0 : index
    %c0_3 = arith.constant 0 : index
    %4 = vector.load %arg4[%c0_2, %c0_3] : memref<32x128xf32, #tpu.memory_space<vmem>>, vector<32x128xf32>
    %cst = arith.constant dense<0.000000e+00> : vector<8x128xf32>
    %5 = tpu.matmul %3, %4, %cst {dimension_numbers = #tpu.dot_dimension_numbers<[1], [0], [0], [1], [0, 0, 1, 1], [], []>} : vector<8x32xf32>, vector<32x128xf32>, vector<8x128xf32> -> vector<8x128xf32>
    %c128_i32 = arith.constant 128 : i32
    %6 = arith.muli %arg0, %c128_i32 : i32
    %7 = tpu.iota {dimensions = array<i32: 1>} : vector<8x128xi32>
    %8 = vector.broadcast %6 : i32 to vector<8x128xi32>
    %9 = arith.addi %8, %7 : vector<8x128xi32>
    %c512_i32 = arith.constant 512 : i32
    %10 = vector.broadcast %c512_i32 : i32 to vector<8x128xi32>
    %11 = arith.cmpi slt, %9, %10 : vector<8x128xi32>
    %cst_4 = arith.constant 0xFF800000 : f32
    %12 = vector.broadcast %cst_4 : f32 to vector<8x128xf32>
    %13 = arith.select %11, %5, %12 : vector<8x128xi1>, vector<8x128xf32>
    %c0_5 = arith.constant 0 : index
    %c0_6 = arith.constant 0 : index
    %14 = vector.load %arg2[%c0_5, %c0_6] : memref<8x1xi32, #tpu.memory_space<vmem>>, vector<8x1xi32>
    %c0_7 = arith.constant 0 : index
    %c0_8 = arith.constant 0 : index
    %15 = vector.load %arg9[%c0_7, %c0_8] : memref<8x1xf32, #tpu.memory_space<vmem>>, vector<8x1xf32>
    %16 = vector.broadcast %14 : vector<8x1xi32> to vector<8x128xi32>
    %17 = arith.cmpi eq, %9, %16 : vector<8x128xi32>
    %cst_9 = arith.constant 0.000000e+00 : f32
    %18 = vector.broadcast %cst_9 : f32 to vector<8x128xf32>
    %19 = arith.select %17, %13, %18 : vector<8x128xi1>, vector<8x128xf32>
    %cst_10 = arith.constant dense<0.000000e+00> : vector<8xf32>
    %20 = vector.multi_reduction <add>, %19, %cst_10 [1] : vector<8x128xf32> to vector<8xf32>
    %21 = vector.shape_cast %20 : vector<8xf32> to vector<8x1xf32>
    %22 = arith.addf %15, %21 : vector<8x1xf32>
    %c0_11 = arith.constant 0 : index
    %c0_12 = arith.constant 0 : index
    %23 = vector.load %arg9[%c0_11, %c0_12] : memref<8x1xf32, #tpu.memory_space<vmem>>, vector<8x1xf32>
    tpu.vector_store %arg9[%c0_11, %c0_12], %22 {strides = array<i32>} : memref<8x1xf32, #tpu.memory_space<vmem>>, vector<8x1xf32>,
    %c0_13 = arith.constant 0 : index
    %c0_14 = arith.constant 0 : index
    %24 = vector.load %arg7[%c0_13, %c0_14] : memref<8x1xf32, #tpu.memory_space<vmem>>, vector<8x1xf32>
    %cst_15 = arith.constant dense<0xFF800000> : vector<8xf32>
    %25 = vector.multi_reduction <maximumf>, %13, %cst_15 [1] : vector<8x128xf32> to vector<8xf32>
    %26 = vector.shape_cast %25 : vector<8xf32> to vector<8x1xf32>
    %27 = arith.maximumf %24, %26 : vector<8x1xf32>
    %c0_16 = arith.constant 0 : index
    %c0_17 = arith.constant 0 : index
    %28 = vector.load %arg8[%c0_16, %c0_17] : memref<8x1xf32, #tpu.memory_space<vmem>>, vector<8x1xf32>
    %29 = arith.subf %24, %27 : vector<8x1xf32>
    %30 = math.exp %29 : vector<8x1xf32>
    %31 = arith.mulf %28, %30 : vector<8x1xf32>
    %32 = vector.broadcast %27 : vector<8x1xf32> to vector<8x128xf32>
    %33 = arith.subf %13, %32 : vector<8x128xf32>
    %34 = math.exp %33 : vector<8x128xf32>
    %cst_18 = arith.constant dense<0.000000e+00> : vector<8xf32>
    %35 = vector.multi_reduction <add>, %34, %cst_18 [1] : vector<8x128xf32> to vector<8xf32>
    %36 = vector.shape_cast %35 : vector<8xf32> to vector<8x1xf32>
    %37 = arith.addf %31, %36 : vector<8x1xf32>
    %c0_19 = arith.constant 0 : index
    %c0_20 = arith.constant 0 : index
    %38 = vector.load %arg8[%c0_19, %c0_20] : memref<8x1xf32, #tpu.memory_space<vmem>>, vector<8x1xf32>
    tpu.vector_store %arg8[%c0_19, %c0_20], %37 {strides = array<i32>} : memref<8x1xf32, #tpu.memory_space<vmem>>, vector<8x1xf32>,
    %c0_21 = arith.constant 0 : index
    %c0_22 = arith.constant 0 : index
    %39 = vector.load %arg7[%c0_21, %c0_22] : memref<8x1xf32, #tpu.memory_space<vmem>>, vector<8x1xf32>
    tpu.vector_store %arg7[%c0_21, %c0_22], %27 {strides = array<i32>} : memref<8x1xf32, #tpu.memory_space<vmem>>, vector<8x1xf32>,
    %c3_i32 = arith.constant 3 : i32
    %40 = arith.cmpi eq, %arg0, %c3_i32 : i32
    %41 = arith.extui %40 : i1 to i32
    %c0_i32_23 = arith.constant 0 : i32
    %42 = arith.cmpi ne, %41, %c0_i32_23 : i32
    scf.if %42 {
      %c0_24 = arith.constant 0 : index
      %c0_25 = arith.constant 0 : index
      %43 = vector.load %arg9[%c0_24, %c0_25] : memref<8x1xf32, #tpu.memory_space<vmem>>, vector<8x1xf32>
      %c0_26 = arith.constant 0 : index
      %c0_27 = arith.constant 0 : index
      %44 = vector.load %arg7[%c0_26, %c0_27] : memref<8x1xf32, #tpu.memory_space<vmem>>, vector<8x1xf32>
      %45 = arith.subf %43, %44 : vector<8x1xf32>
      %c0_28 = arith.constant 0 : index
      %c0_29 = arith.constant 0 : index
      %46 = vector.load %arg8[%c0_28, %c0_29] : memref<8x1xf32, #tpu.memory_space<vmem>>, vector<8x1xf32>
      %47 = math.log %46 : vector<8x1xf32>
      %48 = arith.subf %45, %47 : vector<8x1xf32>
      %49 = vector.shape_cast %48 : vector<8x1xf32> to vector<1x8x1xf32>
      %cst_30 = arith.constant dense<0.000000e+00> : vector<1xf32>
      %50 = vector.multi_reduction <add>, %49, %cst_30 [1, 2] : vector<1x8x1xf32> to vector<1xf32>
      %51 = vector.shape_cast %50 : vector<1xf32> to vector<1x1x1xf32>
      %52 = vector.extract %51[0, 0, 0] : f32 from vector<1x1x1xf32>
      %cst_31 = arith.constant 0.000000e+00 : f32
      %53 = arith.subf %cst_31, %52 : f32
      %cst_32 = arith.constant 8.000000e+00 : f32
      %54 = arith.divf %53, %cst_32 : f32
      %55 = vector.broadcast %54 : f32 to vector<1x1xf32>
      %c0_33 = arith.constant 0 : index
      %c0_34 = arith.constant 0 : index
      %56 = vector.load %arg5[%c0_33, %c0_34] : memref<1x1xf32, #tpu.memory_space<vmem>>, vector<1x1xf32>
      tpu.vector_store %arg5[%c0_33, %c0_34], %55 {strides = array<i32>} : memref<1x1xf32, #tpu.memory_space<vmem>>, vector<1x1xf32>,
    } else {
    }
    return
  }
  func.func @transform_0(%arg0: i32) -> (i32, i32) {
    %c0_i32 = arith.constant 0 : i32
    %c0_i32_0 = arith.constant 0 : i32
    %c0_i32_1 = arith.constant 0 : i32
    return %c0_i32, %c0_i32_0 : i32, i32
  }
  func.func @transform_1(%arg0: i32) -> (i32, i32) {
    %c0_i32 = arith.constant 0 : i32
    %c0_i32_0 = arith.constant 0 : i32
    %c0_i32_1 = arith.constant 0 : i32
    return %c0_i32, %c0_i32_0 : i32, i32
  }
  func.func @transform_2(%arg0: i32) -> (i32, i32) {
    %c0_i32 = arith.constant 0 : i32
    %c0_i32_0 = arith.constant 0 : i32
    %c0_i32_1 = arith.constant 0 : i32
    return %c0_i32, %c0_i32_0 : i32, i32
  }
  func.func @transform_3(%arg0: i32) -> (i32, i32) {
    %c0_i32 = arith.constant 0 : i32
    %c0_i32_0 = arith.constant 0 : i32
    return %c0_i32, %arg0 : i32, i32
  }
  func.func @transform_4(%arg0: i32) -> (i32, i32) {
    %c0_i32 = arith.constant 0 : i32
    %c0_i32_0 = arith.constant 0 : i32
    %c0_i32_1 = arith.constant 0 : i32
    return %c0_i32, %c0_i32_0 : i32, i32
  }
}

</mosaic_0001>

<llo_original>
// kernel: tpu_custom_call.1
$region0: #{tpu_custom_call.1}
  #allocation0 [shape = 'u32[]', space=smem, size = 0x4, offset = 0x4, fixed_abs, tag = 'smem constant byte address 0x4 - core index']
  #allocation1 [shape = 'u32[144,128]{1,0:T(1,128)}', space=vmem, size = 0x12000, scoped, tag = 'internal scratch']
  #allocation2 [shape = 'f32[8,32]{1,0:T(8,128)}', space=vmem, size = 0x1000, scoped, tag = 'scratch operand']
  #allocation3 [shape = 'f32[8,1]{1,0:T(8,128)}', space=vmem, size = 0x1000, scoped, tag = 'scratch operand']
  #allocation4 [shape = 'f32[8,1]{1,0:T(8,128)}', space=vmem, size = 0x1000, scoped, tag = 'scratch operand']
  #allocation5 [shape = 'f32[8,1]{1,0:T(8,128)}', space=vmem, size = 0x1000, scoped, tag = 'scratch operand']
  %s0 = inlined_call_operand.vmem [shape: s32[8,1], index: 0, kind: input, shape index: {}]
  %s1 = inlined_call_operand.vmem [shape: s32[8,1], index: 1, kind: input, shape index: {}]
  %s2 = inlined_call_operand.vmem [shape: f32[512,32], index: 2, kind: input, shape index: {}]
  %s3 = inlined_call_operand.vmem [shape: f32[32,512], index: 3, kind: input, shape index: {}]
  %s4 = inlined_call_operand.hbm [shape: f32[1,1], index: 4, kind: output, shape index: {}]
  %s5 = sld [smem:[#allocation0]]
  $region95: #{tpu_custom_call.1} parent=0
    _
  %s7 = ssub.s32 1, %s5
  %s8 = scalar_select 0, %s7, %s5
  $region1: #{tpu_custom_call.1} parent=0
    #allocation6 [shape = 'u8[32768]{0}', space=vmem, size = 0x8000, scoped, tag = 'input window, operand 3']
    #allocation7 [shape = 'u8[512]{0}', space=vmem, size = 0x400, scoped, tag = 'output window, operand 0, single buffered']
    #allocation8 [shape = 's32[2]{0}', space=sflag, size = 0x8, scoped, tag = 'scoped memory for tpu_custom_call.1']
    %9 = vsyncpa [#allocation8], 0
    loop: start=0, step=1, limit=6
    $region2: #{tpu_custom_call.1} parent=1 // loop_pre_header
      _
    $region3: #{tpu_custom_call.1} parent=1 // loop_header
      %s11 = sphi 0, %s15
      %p12 = scmp.ge.s32.totalorder %s11, 6
      %s19 = sphi 0, %s19
      %s21 = sphi 0, %s19
      %s22 = sphi 0, %s21
      %s36 = sphi 0, %s22
      %s40 = sphi 0, %s40
      %s42 = sphi 0, %s40
      %s43 = sphi 0, %s42
      %s57 = sphi 0, %s43
      %s61 = sphi 0, %s61
      %s63 = sphi 0, %s61
      %s64 = sphi 0, %s63
      %s78 = sphi 0, %s64
      %s84 = sphi 0, %s86
      %s87 = sphi 0, %s84
      %s88 = sphi 0, %s87
      %s104 = sphi 0, %s88
      %s108 = sphi 0, %s108
      %s110 = sphi 0, %s108
      %s111 = sphi 0, %s110
      %s125 = sphi 0, %s111
    $region4: #{tpu_custom_call.1} parent=1 // loop_header_branch
      %14 = sbr.rel (%p12) target = $region8
    $region5: #{tpu_custom_call.1} parent=1 // loop_body
      %s16 = ssub.s32 %s11, 1
      %s17 = ssub.s32 %s11, 2
      %s18 = sadd.s32 %s11, 1
      %s20 = sadd.s32 %s19, 1
      %p23 = scmp.eq.s32.totalorder %s11, 3
      %p24 = scmp.ne.s32.totalorder %s19, %s21
      %p25 = scmp.eq.s32.totalorder %s11, 0
      %p26 = por %p24, %p25
      %p27 = scmp.ne.s32.totalorder %s19, %s21
      %p28 = scmp.eq.s32.totalorder %s16, 3
      %p29 = por %p27, %p28
      %p30 = scmp.ne.s32.totalorder %s21, %s22
      %p31 = scmp.eq.s32.totalorder %s16, 0
      %p32 = por %p30, %p31
      %p33 = scmp.ne.s32.totalorder %s21, %s22
      %p34 = scmp.eq.s32.totalorder %s17, 3
      %p35 = por %p33, %p34
      %p37 = scmp.ne.s32.totalorder %s22, %s36
      %p38 = scmp.eq.s32.totalorder %s17, 0
      %p39 = por %p37, %p38
      %s41 = sadd.s32 %s40, 1
      %p44 = scmp.eq.s32.totalorder %s11, 3
      %p45 = scmp.ne.s32.totalorder %s40, %s42
      %p46 = scmp.eq.s32.totalorder %s11, 0
      %p47 = por %p45, %p46
      %p48 = scmp.ne.s32.totalorder %s40, %s42
      %p49 = scmp.eq.s32.totalorder %s16, 3
      %p50 = por %p48, %p49
      %p51 = scmp.ne.s32.totalorder %s42, %s43
      %p52 = scmp.eq.s32.totalorder %s16, 0
      %p53 = por %p51, %p52
      %p54 = scmp.ne.s32.totalorder %s42, %s43
      %p55 = scmp.eq.s32.totalorder %s17, 3
      %p56 = por %p54, %p55
      %p58 = scmp.ne.s32.totalorder %s43, %s57
      %p59 = scmp.eq.s32.totalorder %s17, 0
      %p60 = por %p58, %p59
      %s62 = sadd.s32 %s61, 1
      %p65 = scmp.eq.s32.totalorder %s11, 3
      %p66 = scmp.ne.s32.totalorder %s61, %s63
      %p67 = scmp.eq.s32.totalorder %s11, 0
      %p68 = por %p66, %p67
      %p69 = scmp.ne.s32.totalorder %s61, %s63
      %p70 = scmp.eq.s32.totalorder %s16, 3
      %p71 = por %p69, %p70
      %p72 = scmp.ne.s32.totalorder %s63, %s64
      %p73 = scmp.eq.s32.totalorder %s16, 0
      %p74 = por %p72, %p73
      %p75 = scmp.ne.s32.totalorder %s63, %s64
      %p76 = scmp.eq.s32.totalorder %s17, 3
      %p77 = por %p75, %p76
      %p79 = scmp.ne.s32.totalorder %s64, %s78
      %p80 = scmp.eq.s32.totalorder %s17, 0
      %p81 = por %p79, %p80
      %s82 = ssub.s32 %s11, %s18
      %p83 = scmp.eq.s32.totalorder %s82, 0
      %s85 = sadd.s32 %s84, 1
      %s86 = scalar_select %p83, %s84, %s85
      %p89 = pneg %p83
      %p90 = scmp.eq.s32.totalorder %s11, 3
      %p91 = por %p89, %p90
      %p92 = scmp.ne.s32.totalorder %s84, %s87
      %p93 = scmp.eq.s32.totalorder %s11, 0
      %p94 = por %p92, %p93
      %p95 = scmp.ne.s32.totalorder %s84, %s87
      %p96 = scmp.eq.s32.totalorder %s16, 3
      %p97 = por %p95, %p96
      %p98 = scmp.ne.s32.totalorder %s87, %s88
      %p99 = scmp.eq.s32.totalorder %s16, 0
      %p100 = por %p98, %p99
      %p101 = scmp.ne.s32.totalorder %s87, %s88
      %p102 = scmp.eq.s32.totalorder %s17, 3
      %p103 = por %p101, %p102
      %p105 = scmp.ne.s32.totalorder %s88, %s104
      %p106 = scmp.eq.s32.totalorder %s17, 0
      %p107 = por %p105, %p106
      %s109 = sadd.s32 %s108, 1
      %p112 = scmp.eq.s32.totalorder %s11, 3
      %p113 = scmp.ne.s32.totalorder %s108, %s110
      %p114 = scmp.eq.s32.totalorder %s11, 0
      %p115 = por %p113, %p114
      %p116 = scmp.ne.s32.totalorder %s108, %s110
      %p117 = scmp.eq.s32.totalorder %s16, 3
      %p118 = por %p116, %p117
      %p119 = scmp.ne.s32.totalorder %s110, %s111
      %p120 = scmp.eq.s32.totalorder %s16, 0
      %p121 = por %p119, %p120
      %p122 = scmp.ne.s32.totalorder %s110, %s111
      %p123 = scmp.eq.s32.totalorder %s17, 3
      %p124 = por %p122, %p123
      %p126 = scmp.ne.s32.totalorder %s111, %s125
      %p127 = scmp.eq.s32.totalorder %s17, 0
      %p128 = por %p126, %p127
      %p129 = scmp.le.s32.totalorder 1, %s11
      %p130 = scmp.lt.s32.totalorder %s11, 5
      %p131 = pnand %p129, %p130
      %p132 = pneg %p131
      // Predicated region
      $region9: #{tpu_custom_call.1} parent=5 // pred_check
        _
      $region10: #{tpu_custom_call.1} parent=5 // pred_check_branch
        %134 = sbr.rel (%p131) target = $region12
      $region11: #{tpu_custom_call.1} parent=5 // pred_region
        %s135 = ssub.s32 %s11, 1
        // Predicated region
        $region13: #{tpu_custom_call.1} parent=11 // pred_check
          %p136 = pneg %p32
        $region14: #{tpu_custom_call.1} parent=11 // pred_check_branch
          %138 = sbr.rel (%p136) target = $region16
        $region15: #{tpu_custom_call.1} parent=11 // pred_region
          _
        $region16: #{tpu_custom_call.1} parent=11 // pred_fallthru
          _
        // Predicated region
        $region17: #{tpu_custom_call.1} parent=11 // pred_check
          %p139 = pneg %p53
        $region18: #{tpu_custom_call.1} parent=11 // pred_check_branch
          %141 = sbr.rel (%p139) target = $region20
        $region19: #{tpu_custom_call.1} parent=11 // pred_region
          _
        $region20: #{tpu_custom_call.1} parent=11 // pred_fallthru
          _
        // Predicated region
        $region21: #{tpu_custom_call.1} parent=11 // pred_check
          %p142 = pneg %p74
        $region22: #{tpu_custom_call.1} parent=11 // pred_check_branch
          %144 = sbr.rel (%p142) target = $region24
        $region23: #{tpu_custom_call.1} parent=11 // pred_region
          _
        $region24: #{tpu_custom_call.1} parent=11 // pred_fallthru
          _
      $region12: #{tpu_custom_call.1} parent=5 // pred_fallthru
        _
      %p145 = scmp.lt.s32.totalorder %s11, 4
      // Predicated region
      $region25: #{tpu_custom_call.1} parent=5 // pred_check
        %p146 = pneg %p145
      $region26: #{tpu_custom_call.1} parent=5 // pred_check_branch
        %148 = sbr.rel (%p146) target = $region28
      $region27: #{tpu_custom_call.1} parent=5 // pred_region
        // Predicated region
        $region29: #{tpu_custom_call.1} parent=27 // pred_check
          %p149 = pneg %p94
        $region30: #{tpu_custom_call.1} parent=27 // pred_check_branch
          %151 = sbr.rel (%p149) target = $region32
        $region31: #{tpu_custom_call.1} parent=27 // pred_region
          %s152 = sand.u32 %s84, 1
          %s153 = sand.u32 %s84, 1
          %s154 = smul.addr %s153, 32
          %s155 = scalar_lea.vmem [#allocation6], %s154
          %s156 = smul.addr %s11, 8
          %s157 = scalar_lea.vmem %s3, %s156
          // Predicated region
          $region33: #{tpu_custom_call.1} parent=31 // pred_check
            _
          $region34: #{tpu_custom_call.1} parent=31 // pred_check_branch
            %159 = sbr.rel (0) target = $region36
          $region35: #{tpu_custom_call.1} parent=31 // pred_region
            // Predicated region
            $region37: #{tpu_custom_call.1} parent=35 // pred_check
              _
            $region38: #{tpu_custom_call.1} parent=35 // pred_check_branch
              %161 = sbr.rel (0) target = $region40
            $region39: #{tpu_custom_call.1} parent=35 // pred_region
              // Predicated region
              $region52: #{tpu_custom_call.1} parent=39 // pred_check
                _
              $region53: #{tpu_custom_call.1} parent=39 // pred_check_branch
                %182 = sbr.rel (0) target = $region55
              $region54: #{tpu_custom_call.1} parent=39 // pred_region
                loop: start=0, step=1, limit=1
                $region56: #{tpu_custom_call.1} parent=54 // loop_pre_header
                  _
                $region57: #{tpu_custom_call.1} parent=54 // loop_header
                  %s184 = sphi 0, %s188
                  %p185 = scmp.ge.s32.totalorder %s184, 1
                  %s189 = sphi %s157, %s157
                  %s190 = sphi %s155, %s155
                $region58: #{tpu_custom_call.1} parent=54 // loop_header_branch
                  %187 = sbr.rel (%p185) target = $region62
                $region59: #{tpu_custom_call.1} parent=54 // loop_body
                  %v191 = vld [vmem:[%s189] sm:$0xff]
                  %192 = vst [vmem:[%s190] sm:$0xff] %v191
                  %v193 = vld [vmem:[%s189 + $0x20] sm:$0xff]
                  %194 = vst [vmem:[%s190 + $0x8] sm:$0xff] %v193
                  %v195 = vld [vmem:[%s189 + $0x40] sm:$0xff]
                  %196 = vst [vmem:[%s190 + $0x10] sm:$0xff] %v195
                  %v197 = vld [vmem:[%s189 + $0x60] sm:$0xff]
                  %198 = vst [vmem:[%s190 + $0x18] sm:$0xff] %v197
                $region60: #{tpu_custom_call.1} parent=54 // loop_footer
                  %s188 = sadd.s32 1, %s184
                $region61: #{tpu_custom_call.1} parent=54 // loop_footer_branch
                  %183 = sbr.rel target = $region57
                $region62: #{tpu_custom_call.1} parent=54 // loop_exit
                  _
              $region55: #{tpu_custom_call.1} parent=39 // pred_fallthru
                _
              // Predicated region
              $region63: #{tpu_custom_call.1} parent=39 // pred_check
                _
              $region64: #{tpu_custom_call.1} parent=39 // pred_check_branch
                %200 = sbr.rel target = $region66
              $region65: #{tpu_custom_call.1} parent=39 // pred_region
                _
              $region66: #{tpu_custom_call.1} parent=39 // pred_fallthru
                _
            $region40: #{tpu_custom_call.1} parent=35 // pred_fallthru
              _
            // Predicated region
            $region41: #{tpu_custom_call.1} parent=35 // pred_check
              _
            $region42: #{tpu_custom_call.1} parent=35 // pred_check_branch
              %163 = sbr.rel target = $region44
            $region43: #{tpu_custom_call.1} parent=35 // pred_region
              loop: start=0, step=1, limit=1
              $region45: #{tpu_custom_call.1} parent=43 // loop_pre_header
                _
              $region46: #{tpu_custom_call.1} parent=43 // loop_header
                %s166 = sphi 0, %s170
                %p167 = scmp.ge.s32.totalorder %s166, 1
                %s171 = sphi %s157, %s157
                %s172 = sphi %s155, %s155
              $region47: #{tpu_custom_call.1} parent=43 // loop_header_branch
                %169 = sbr.rel (%p167) target = $region51
              $region48: #{tpu_custom_call.1} parent=43 // loop_body
                %v173 = vld [vmem:[%s171] sm:$0xff]
                %174 = vst [vmem:[%s172] sm:$0xff] %v173
                %v175 = vld [vmem:[%s171 + $0x20] sm:$0xff]
                %176 = vst [vmem:[%s172 + $0x8] sm:$0xff] %v175
                %v177 = vld [vmem:[%s171 + $0x40] sm:$0xff]
                %178 = vst [vmem:[%s172 + $0x10] sm:$0xff] %v177
                %v179 = vld [vmem:[%s171 + $0x60] sm:$0xff]
                %180 = vst [vmem:[%s172 + $0x18] sm:$0xff] %v179
              $region49: #{tpu_custom_call.1} parent=43 // loop_footer
                %s170 = sadd.s32 1, %s166
              $region50: #{tpu_custom_call.1} parent=43 // loop_footer_branch
                %165 = sbr.rel target = $region46
              $region51: #{tpu_custom_call.1} parent=43 // loop_exit
                _
            $region44: #{tpu_custom_call.1} parent=35 // pred_fallthru
              _
          $region36: #{tpu_custom_call.1} parent=31 // pred_fallthru
            _
          %201 = vnop
        $region32: #{tpu_custom_call.1} parent=27 // pred_fallthru
          _
      $region28: #{tpu_custom_call.1} parent=5 // pred_fallthru
        _
      %p202 = scmp.le.s32.totalorder 1, %s11
      %p203 = scmp.lt.s32.totalorder %s11, 5
      %p204 = pnand %p202, %p203
      %p205 = pneg %p204
      // Predicated region
      $region67: #{tpu_custom_call.1} parent=5 // pred_check
        _
      $region68: #{tpu_custom_call.1} parent=5 // pred_check_branch
        %207 = sbr.rel (%p204) target = $region70
      $region69: #{tpu_custom_call.1} parent=5 // pred_region
        %s208 = ssub.s32 %s11, 1
        %s209 = sand.u32 %s87, 1
        %s210 = sand.u32 %s87, 1
        %s211 = smul.addr %s210, 32
        %s212 = scalar_lea.vmem [#allocation6], %s211
        // Predicated region
        $region71: #{tpu_custom_call.1} parent=69 // pred_check
          %p213 = pneg %p100
        $region72: #{tpu_custom_call.1} parent=69 // pred_check_branch
          %215 = sbr.rel (%p213) target = $region74
        $region73: #{tpu_custom_call.1} parent=69 // pred_region
          _
        $region74: #{tpu_custom_call.1} parent=69 // pred_fallthru
          _
        %p216 = pneg %p32
        %p217 = pneg %p29
        %p218 = pneg %p53
        %p219 = pneg %p50
        %p220 = pneg %p74
        %p221 = pneg %p71
        %s222 = sand.u32 %s87, 1
        %s223 = sand.u32 %s87, 1
        %s224 = smul.addr %s223, 32
        %s225 = scalar_lea.vmem [#allocation6], %s224
        %p226 = pneg %p100
        %p227 = pneg %p97
        %p228 = pneg %p121
        %p229 = pneg %p118
        %p230 = scmp.eq.s32.totalorder %s16, 0
        // Predicated region
        $region75: #{tpu_custom_call.1} parent=69 // pred_check
          %p231 = pneg %p230
        $region76: #{tpu_custom_call.1} parent=69 // pred_check_branch
          %233 = sbr.rel (%p231) target = $region78
        $region77: #{tpu_custom_call.1} parent=69 // pred_region
          %v234 = vld [vmem:[%s0] sm:$0xff]
          %v235 = vlaneseq
          %v236 = vand.u32 %v235, 127
          %v237 = vadd.s32 %v236, 128
          %v238 = vadd.s32 %v236, 256
          %v239 = vadd.s32 %v236, 384
          %240 = vset.pattern.permute.xlu0 0
          %241 = vperm.xlu0 %240, %v234
          %v242 = vpop.permute.xlu0 %241
          %vm243 = vcmp.eq.s32.totalorder %v236, %v242
          %vm244 = vcmp.eq.s32.totalorder %v237, %v242
          %vm245 = vcmp.eq.s32.totalorder %v238, %v242
          %vm246 = vcmp.eq.s32.totalorder %v239, %v242
          %v247 = vsel %vm243, 1, 0
          %v248 = vsel %vm244, 1, 0
          %v249 = vsel %vm245, 1, 0
          %v250 = vsel %vm246, 1, 0
          %v251 = vcvt.s32.f32 %v247
          %v252 = vcvt.s32.f32 %v248
          %v253 = vcvt.s32.f32 %v249
          %v254 = vcvt.s32.f32 %v250
          %v255 = vld [vmem:[%s2] sm:$0xff]
          %v256 = vld [vmem:[%s2 + $0x8] sm:$0xff]
          %v257 = vld [vmem:[%s2 + $0x10] sm:$0xff]
          %v258 = vld [vmem:[%s2 + $0x18] sm:$0xff]
          %v259 = vld [vmem:[%s2 + $0x20] sm:$0xff]
          %v260 = vld [vmem:[%s2 + $0x28] sm:$0xff]
          %v261 = vld [vmem:[%s2 + $0x30] sm:$0xff]
          %v262 = vld [vmem:[%s2 + $0x38] sm:$0xff]
          %v263 = vld [vmem:[%s2 + $0x40] sm:$0xff]
          %v264 = vld [vmem:[%s2 + $0x48] sm:$0xff]
          %v265 = vld [vmem:[%s2 + $0x50] sm:$0xff]
          %v266 = vld [vmem:[%s2 + $0x58] sm:$0xff]
          %v267 = vld [vmem:[%s2 + $0x60] sm:$0xff]
          %v268 = vld [vmem:[%s2 + $0x68] sm:$0xff]
          %v269 = vld [vmem:[%s2 + $0x70] sm:$0xff]
          %v270 = vld [vmem:[%s2 + $0x78] sm:$0xff]
          %v271 = vld [vmem:[%s2 + $0x80] sm:$0xff]
          %v272 = vld [vmem:[%s2 + $0x88] sm:$0xff]
          %v273 = vld [vmem:[%s2 + $0x90] sm:$0xff]
          %v274 = vld [vmem:[%s2 + $0x98] sm:$0xff]
          %v275 = vld [vmem:[%s2 + $0xa0] sm:$0xff]
          %v276 = vld [vmem:[%s2 + $0xa8] sm:$0xff]
          %v277 = vld [vmem:[%s2 + $0xb0] sm:$0xff]
          %v278 = vld [vmem:[%s2 + $0xb8] sm:$0xff]
          %v279 = vld [vmem:[%s2 + $0xc0] sm:$0xff]
          %v280 = vld [vmem:[%s2 + $0xc8] sm:$0xff]
          %v281 = vld [vmem:[%s2 + $0xd0] sm:$0xff]
          %v282 = vld [vmem:[%s2 + $0xd8] sm:$0xff]
          %v283 = vld [vmem:[%s2 + $0xe0] sm:$0xff]
          %v284 = vld [vmem:[%s2 + $0xe8] sm:$0xff]
          %v285 = vld [vmem:[%s2 + $0xf0] sm:$0xff]
          %v286 = vld [vmem:[%s2 + $0xf8] sm:$0xff]
          %v287 = vld [vmem:[%s2 + $0x100] sm:$0xff]
          %v288 = vld [vmem:[%s2 + $0x108] sm:$0xff]
          %v289 = vld [vmem:[%s2 + $0x110] sm:$0xff]
          %v290 = vld [vmem:[%s2 + $0x118] sm:$0xff]
          %v291 = vld [vmem:[%s2 + $0x120] sm:$0xff]
          %v292 = vld [vmem:[%s2 + $0x128] sm:$0xff]
          %v293 = vld [vmem:[%s2 + $0x130] sm:$0xff]
          %v294 = vld [vmem:[%s2 + $0x138] sm:$0xff]
          %v295 = vld [vmem:[%s2 + $0x140] sm:$0xff]
          %v296 = vld [vmem:[%s2 + $0x148] sm:$0xff]
          %v297 = vld [vmem:[%s2 + $0x150] sm:$0xff]
          %v298 = vld [vmem:[%s2 + $0x158] sm:$0xff]
          %v299 = vld [vmem:[%s2 + $0x160] sm:$0xff]
          %v300 = vld [vmem:[%s2 + $0x168] sm:$0xff]
          %v301 = vld [vmem:[%s2 + $0x170] sm:$0xff]
          %v302 = vld [vmem:[%s2 + $0x178] sm:$0xff]
          %v303 = vld [vmem:[%s2 + $0x180] sm:$0xff]
          %v304 = vld [vmem:[%s2 + $0x188] sm:$0xff]
          %v305 = vld [vmem:[%s2 + $0x190] sm:$0xff]
          %v306 = vld [vmem:[%s2 + $0x198] sm:$0xff]
          %v307 = vld [vmem:[%s2 + $0x1a0] sm:$0xff]
          %v308 = vld [vmem:[%s2 + $0x1a8] sm:$0xff]
          %v309 = vld [vmem:[%s2 + $0x1b0] sm:$0xff]
          %v310 = vld [vmem:[%s2 + $0x1b8] sm:$0xff]
          %v311 = vld [vmem:[%s2 + $0x1c0] sm:$0xff]
          %v312 = vld [vmem:[%s2 + $0x1c8] sm:$0xff]
          %v313 = vld [vmem:[%s2 + $0x1d0] sm:$0xff]
          %v314 = vld [vmem:[%s2 + $0x1d8] sm:$0xff]
          %v315 = vld [vmem:[%s2 + $0x1e0] sm:$0xff]
          %v316 = vld [vmem:[%s2 + $0x1e8] sm:$0xff]
          %v317 = vld [vmem:[%s2 + $0x1f0] sm:$0xff]
          %v318 = vld [vmem:[%s2 + $0x1f8] sm:$0xff]
          %319 = vmatprep.subr.mxu0 0.0
          %320 = vmatpush1.msra.mxu0 %v255
          %321 = vmatprep.subr.mxu0 0.0
          %322 = vmatpush1.msra.mxu0 %v256
          %323 = vmatprep.subr.mxu0 0.0
          %324 = vmatpush1.msra.mxu0 %v257
          %325 = vmatprep.subr.mxu0 0.0
          %326 = vmatpush1.msra.mxu0 %v258
          %327 = vmatprep.subr.mxu0 0.0
          %328 = vmatpush1.msra.mxu0 %v259
          %329 = vmatprep.subr.mxu0 0.0
          %330 = vmatpush1.msra.mxu0 %v260
          %331 = vmatprep.subr.mxu0 0.0
          %332 = vmatpush1.msra.mxu0 %v261
          %333 = vmatprep.subr.mxu0 0.0
          %334 = vmatpush1.msra.mxu0 %v262
          %335 = vmatprep.subr.mxu0 0.0
          %336 = vmatpush1.msra.mxu0 %v263
          %337 = vmatprep.subr.mxu0 0.0
          %338 = vmatpush1.msra.mxu0 %v264
          %339 = vmatprep.subr.mxu0 0.0
          %340 = vmatpush1.msra.mxu0 %v265
          %341 = vmatprep.subr.mxu0 0.0
          %342 = vmatpush1.msra.mxu0 %v266
          %343 = vmatprep.subr.mxu0 0.0
          %344 = vmatpush1.msra.mxu0 %v267
          %345 = vmatprep.subr.mxu0 0.0
          %346 = vmatpush1.msra.mxu0 %v268
          %347 = vmatprep.subr.mxu0 0.0
          %348 = vmatpush1.msra.mxu0 %v269
          %349 = vmatprep.subr.mxu0 0.0
          %350 = vmatpush1.msra.mxu0 %v270
          %351 = vmatprep.subr.mxu0 0.0
          %352 = vmatpush1.msra.mxu0 %v271
          %353 = vmatprep.subr.mxu0 0.0
          %354 = vmatpush1.msra.mxu0 %v272
          %355 = vmatprep.subr.mxu0 0.0
          %356 = vmatpush1.msra.mxu0 %v273
          %357 = vmatprep.subr.mxu0 0.0
          %358 = vmatpush1.msra.mxu0 %v274
          %359 = vmatprep.subr.mxu0 0.0
          %360 = vmatpush1.msra.mxu0 %v275
          %361 = vmatprep.subr.mxu0 0.0
          %362 = vmatpush1.msra.mxu0 %v276
          %363 = vmatprep.subr.mxu0 0.0
          %364 = vmatpush1.msra.mxu0 %v277
          %365 = vmatprep.subr.mxu0 0.0
          %366 = vmatpush1.msra.mxu0 %v278
          %367 = vmatprep.subr.mxu0 0.0
          %368 = vmatpush1.msra.mxu0 %v279
          %369 = vmatprep.subr.mxu0 0.0
          %370 = vmatpush1.msra.mxu0 %v280
          %371 = vmatprep.subr.mxu0 0.0
          %372 = vmatpush1.msra.mxu0 %v281
          %373 = vmatprep.subr.mxu0 0.0
          %374 = vmatpush1.msra.mxu0 %v282
          %375 = vmatprep.subr.mxu0 0.0
          %376 = vmatpush1.msra.mxu0 %v283
          %377 = vmatprep.subr.mxu0 0.0
          %378 = vmatpush1.msra.mxu0 %v284
          %379 = vmatprep.subr.mxu0 0.0
          %380 = vmatpush1.msra.mxu0 %v285
          %381 = vmatprep.subr.mxu0 0.0
          %382 = vmatpush1.msra.mxu0 %v286
          %383 = vmatprep.mubr.f32.mxu0 %v252
          %384 = vmatmul.mubr.f32.gmra.mrb[0].mxu0 %v251
          %v385 = vpop.f32.mrb[0].mxu0
          %v386 = vadd.f32 0.0, %v385
          %v387 = vpop.f32.mrb[0].mxu0
          %388 = vdwg.mxu0
          %389 = vmatprep.subr.mxu0 0.0
          %390 = vmatpush1.msra.mxu0 %v287
          %391 = vmatprep.subr.mxu0 0.0
          %392 = vmatpush1.msra.mxu0 %v288
          %393 = vmatprep.subr.mxu0 0.0
          %394 = vmatpush1.msra.mxu0 %v289
          %395 = vmatprep.subr.mxu0 0.0
          %396 = vmatpush1.msra.mxu0 %v290
          %397 = vmatprep.subr.mxu0 0.0
          %398 = vmatpush1.msra.mxu0 %v291
          %399 = vmatprep.subr.mxu0 0.0
          %400 = vmatpush1.msra.mxu0 %v292
          %401 = vmatprep.subr.mxu0 0.0
          %402 = vmatpush1.msra.mxu0 %v293
          %403 = vmatprep.subr.mxu0 0.0
          %404 = vmatpush1.msra.mxu0 %v294
          %405 = vmatprep.subr.mxu0 0.0
          %406 = vmatpush1.msra.mxu0 %v295
          %407 = vmatprep.subr.mxu0 0.0
          %408 = vmatpush1.msra.mxu0 %v296
          %409 = vmatprep.subr.mxu0 0.0
          %410 = vmatpush1.msra.mxu0 %v297
          %411 = vmatprep.subr.mxu0 0.0
          %412 = vmatpush1.msra.mxu0 %v298
          %413 = vmatprep.subr.mxu0 0.0
          %414 = vmatpush1.msra.mxu0 %v299
          %415 = vmatprep.subr.mxu0 0.0
          %416 = vmatpush1.msra.mxu0 %v300
          %417 = vmatprep.subr.mxu0 0.0
          %418 = vmatpush1.msra.mxu0 %v301
          %419 = vmatprep.subr.mxu0 0.0
          %420 = vmatpush1.msra.mxu0 %v302
          %421 = vmatprep.subr.mxu0 0.0
          %422 = vmatpush1.msra.mxu0 %v303
          %423 = vmatprep.subr.mxu0 0.0
          %424 = vmatpush1.msra.mxu0 %v304
          %425 = vmatprep.subr.mxu0 0.0
          %426 = vmatpush1.msra.mxu0 %v305
          %427 = vmatprep.subr.mxu0 0.0
          %428 = vmatpush1.msra.mxu0 %v306
          %429 = vmatprep.subr.mxu0 0.0
          %430 = vmatpush1.msra.mxu0 %v307
          %431 = vmatprep.subr.mxu0 0.0
          %432 = vmatpush1.msra.mxu0 %v308
          %433 = vmatprep.subr.mxu0 0.0
          %434 = vmatpush1.msra.mxu0 %v309
          %435 = vmatprep.subr.mxu0 0.0
          %436 = vmatpush1.msra.mxu0 %v310
          %437 = vmatprep.subr.mxu0 0.0
          %438 = vmatpush1.msra.mxu0 %v311
          %439 = vmatprep.subr.mxu0 0.0
          %440 = vmatpush1.msra.mxu0 %v312
          %441 = vmatprep.subr.mxu0 0.0
          %442 = vmatpush1.msra.mxu0 %v313
          %443 = vmatprep.subr.mxu0 0.0
          %444 = vmatpush1.msra.mxu0 %v314
          %445 = vmatprep.subr.mxu0 0.0
          %446 = vmatpush1.msra.mxu0 %v315
          %447 = vmatprep.subr.mxu0 0.0
          %448 = vmatpush1.msra.mxu0 %v316
          %449 = vmatprep.subr.mxu0 0.0
          %450 = vmatpush1.msra.mxu0 %v317
          %451 = vmatprep.subr.mxu0 0.0
          %452 = vmatpush1.msra.mxu0 %v318
          %453 = vmatprep.mubr.f32.mxu0 %v254
          %454 = vmatmul.mubr.f32.gmra.mrb[0].mxu0 %v253
          %v455 = vpop.f32.mrb[0].mxu0
          %v456 = vadd.f32 %v386, %v455
          %v457 = vpop.f32.mrb[0].mxu0
          %458 = vdwg.mxu0
          %vm459 = vcmask 261120
          %460 = vst.msk [vmem:[#allocation2] sm:$0xff] %vm459, %v456
          %vm461 = vcmask 7168
          %462 = vst.msk [vmem:[#allocation3] sm:$0xff] %vm461, -inf
          %463 = vst.msk [vmem:[#allocation4] sm:$0xff] %vm461, 0.0
          %464 = vst.msk [vmem:[#allocation5] sm:$0xff] %vm461, 0.0
        $region78: #{tpu_custom_call.1} parent=69 // pred_fallthru
          _
        %v465 = vld [vmem:[#allocation2] sm:$0xff]
        %v466 = vld [vmem:[%s212] sm:$0xff]
        %v467 = vld [vmem:[%s212 + $0x8] sm:$0xff]
        %v468 = vld [vmem:[%s212 + $0x10] sm:$0xff]
        %v469 = vld [vmem:[%s212 + $0x18] sm:$0xff]
        %vm470 = vcmask 261120
        %v472 = vsel %vm470, %v465, 0
        %474 = vmatprep.subr.mxu0 0.0
        %475 = vmatpush1.msra.mxu0 %v466
        %476 = vmatprep.subr.mxu0 0.0
        %477 = vmatpush1.msra.mxu0 %v467
        %478 = vmatprep.subr.mxu0 0.0
        %479 = vmatpush1.msra.mxu0 %v468
        %480 = vmatprep.subr.mxu0 0.0
        %481 = vmatpush1.msra.mxu0 %v469
        %482 = vmatprep.subr.mxu0 0.0
        %483 = vmatpush1.msra.mxu0 0.0
        %484 = vmatprep.subr.mxu0 0.0
        %485 = vmatpush1.msra.mxu0 0.0
        %486 = vmatprep.subr.mxu0 0.0
        %487 = vmatpush1.msra.mxu0 0.0
        %488 = vmatprep.subr.mxu0 0.0
        %489 = vmatpush1.msra.mxu0 0.0
        %490 = vmatprep.subr.mxu0 0.0
        %491 = vmatpush1.msra.mxu0 0.0
        %492 = vmatprep.subr.mxu0 0.0
        %493 = vmatpush1.msra.mxu0 0.0
        %494 = vmatprep.subr.mxu0 0.0
        %495 = vmatpush1.msra.mxu0 0.0
        %496 = vmatprep.subr.mxu0 0.0
        %497 = vmatpush1.msra.mxu0 0.0
        %498 = vmatprep.subr.mxu0 0.0
        %499 = vmatpush1.msra.mxu0 0.0
        %500 = vmatprep.subr.mxu0 0.0
        %501 = vmatpush1.msra.mxu0 0.0
        %502 = vmatprep.subr.mxu0 0.0
        %503 = vmatpush1.msra.mxu0 0.0
        %504 = vmatprep.subr.mxu0 0.0
        %505 = vmatpush1.msra.mxu0 0.0
        %506 = vmatprep.subr.mxu0 0.0
        %507 = vmatpush1.msra.mxu0 0.0
        %508 = vmatprep.subr.mxu0 0.0
        %509 = vmatpush1.msra.mxu0 0.0
        %510 = vmatprep.subr.mxu0 0.0
        %511 = vmatpush1.msra.mxu0 0.0
        %512 = vmatprep.subr.mxu0 0.0
        %513 = vmatpush1.msra.mxu0 0.0
        %514 = vmatprep.subr.mxu0 0.0
        %515 = vmatpush1.msra.mxu0 0.0
        %516 = vmatprep.subr.mxu0 0.0
        %517 = vmatpush1.msra.mxu0 0.0
        %518 = vmatprep.subr.mxu0 0.0
        %519 = vmatpush1.msra.mxu0 0.0
        %520 = vmatprep.subr.mxu0 0.0
        %521 = vmatpush1.msra.mxu0 0.0
        %522 = vmatprep.subr.mxu0 0.0
        %523 = vmatpush1.msra.mxu0 0.0
        %524 = vmatprep.subr.mxu0 0.0
        %525 = vmatpush1.msra.mxu0 0.0
        %526 = vmatprep.subr.mxu0 0.0
        %527 = vmatpush1.msra.mxu0 0.0
        %528 = vmatprep.subr.mxu0 0.0
        %529 = vmatpush1.msra.mxu0 0.0
        %530 = vmatprep.subr.mxu0 0.0
        %531 = vmatpush1.msra.mxu0 0.0
        %532 = vmatprep.subr.mxu0 0.0
        %533 = vmatpush1.msra.mxu0 0.0
        %534 = vmatprep.subr.mxu0 0.0
        %535 = vmatpush1.msra.mxu0 0.0
        %536 = vmatprep.subr.mxu0 0.0
        %537 = vmatpush1.msra.mxu0 0.0
        %538 = vmatprep.mubr.f32.mxu0 0.0
        %539 = vmatmul.mubr.f32.gmra.mrb[0].mxu0 %v472
        %v540 = vpop.f32.mrb[0].mxu0
        %v541 = vadd.f32 0.0, %v540
        %v542 = vpop.f32.mrb[0].mxu0
        %543 = vdwg.mxu0
        %s544 = smul.u32 %s16, 128
        %v545 = vlaneseq
        %v546 = vand.u32 %v545, 127
        %v547 = vstv %s544
        %v548 = vadd.s32 %v547, %v546
        %vm549 = vcmp.lt.s32.totalorder %v548, 512
        %v550 = vsel %vm549, %v541, -inf
        %v551 = vld [vmem:[%s1] sm:$0xff]
        %v552 = vld [vmem:[#allocation5] sm:$0xff]
        %553 = vset.pattern.permute.xlu0 0
        %554 = vperm.xlu0 %553, %v551
        %v555 = vpop.permute.xlu0 %554
        %vm556 = vcmp.eq.s32.totalorder %v548, %v555
        %v557 = vsel %vm556, %v550, 0.0
        %558 = vadd.xlane.f32.xlu0 %v557
        %v559 = vpop.xlane.xlu0 %558
        %v560 = vadd.f32 %v552, %v559
        %vm561 = vcmask 7168
        %562 = vst.msk [vmem:[#allocation5] sm:$0xff] %vm561, %v560
        %v563 = vld [vmem:[#allocation3] sm:$0xff]
        %564 = vmax.xlane.f32.xlu0 %v550
        %v565 = vpop.xlane.xlu0 %564
        %v566 = vmax.f32 %v563, %v565
        %v567 = vld [vmem:[#allocation4] sm:$0xff]
        %v568 = vsub.f32 %v563, %v566
        %v569 = vmul.f32 %v568, 1.442695
        %v570 = vpow.pop %v569
        %v571 = vmul.f32 %v567, %v570
        %573 = vset.pattern.permute.xlu0 0
        %574 = vperm.xlu0 %573, %v566
        %v575 = vpop.permute.xlu0 %574
        %v577 = vsub.f32 %v550, %v575
        %v578 = vmul.f32 %v577, 1.442695
        %v579 = vpow.pop %v578
        %580 = vadd.xlane.f32.xlu0 %v579
        %v581 = vpop.xlane.xlu0 %580
        %v582 = vadd.f32 %v571, %v581
        %583 = vst.msk [vmem:[#allocation4] sm:$0xff] %vm561, %v582
        %584 = vst.msk [vmem:[#allocation3] sm:$0xff] %vm561, %v566
        %p585 = scmp.eq.s32.totalorder %s16, 3
        // Predicated region
        $region79: #{tpu_custom_call.1} parent=69 // pred_check
          %p586 = pneg %p585
        $region80: #{tpu_custom_call.1} parent=69 // pred_check_branch
          %588 = sbr.rel (%p586) target = $region82
        $region81: #{tpu_custom_call.1} parent=69 // pred_region
          %v589 = vld [vmem:[#allocation5] sm:$0xff]
          %v590 = vld [vmem:[#allocation3] sm:$0xff]
          %v591 = vsub.f32 %v589, %v590
          %v592 = vld [vmem:[#allocation4] sm:$0xff]
          %v593 = vlog2.pop %v592
          %v594 = vmul.f32 %v593, 0.6931472
          %v595 = vsub.f32 %v591, %v594
          %v596 = vsel %vm561, %v595, 0.0
          %597 = vadd.xlane.f32.xlu0 %v596
          %v598 = vpop.xlane.xlu0 %597
          %v599 = vrot.slane %v598, 4
          %v600 = vadd.f32 %v598, %v599
          %v601 = vrot.slane %v600, 2
          %v602 = vadd.f32 %v600, %v601
          %v603 = vrot.slane %v602, 1
          %v604 = vadd.f32 %v602, %v603
          %s605 = vtos %v604
          %s606 = ssub.f32 0.0, %s605
          %v607 = vrcp.pop 8.0
          %s608 = vtos %v607
          %s609 = smul.f32 %s606, %s608
          %v610 = vstv %s609
          %vm611 = vcmask 0
          %612 = vst.msk [vmem:[#allocation7] sm:$0x1] %vm611, %v610
        $region82: #{tpu_custom_call.1} parent=69 // pred_fallthru
          _
        // Predicated region
        $region83: #{tpu_custom_call.1} parent=69 // pred_check
          %p613 = pneg %p118
        $region84: #{tpu_custom_call.1} parent=69 // pred_check_branch
          %615 = sbr.rel (%p613) target = $region86
        $region85: #{tpu_custom_call.1} parent=69 // pred_region
          %s617 = ssub.s32 16, 16
          %618 = vsyncadd [#allocation8], %s617
          %s620 = sshll.u32 [#allocation7], 4
          %s621 = int_to_ptr.vmem [resolvable:$true] %s620
          %623 = dma.vmem_to_hbm [thread:$0]  %s621, 16, %s4, [#allocation8]
        $region86: #{tpu_custom_call.1} parent=69 // pred_fallthru
          _
        // Predicated region
        $region87: #{tpu_custom_call.1} parent=69 // pred_check
          %p624 = pneg %p118
        $region88: #{tpu_custom_call.1} parent=69 // pred_check_branch
          %626 = sbr.rel (%p624) target = $region90
        $region89: #{tpu_custom_call.1} parent=69 // pred_region
          %627 = dma.done [#allocation8], 16
        $region90: #{tpu_custom_call.1} parent=69 // pred_fallthru
          _
      $region70: #{tpu_custom_call.1} parent=5 // pred_fallthru
        _
      %p628 = scmp.le.s32.totalorder 2, %s11
      // Predicated region
      $region91: #{tpu_custom_call.1} parent=5 // pred_check
        %p629 = pneg %p628
      $region92: #{tpu_custom_call.1} parent=5 // pred_check_branch
        %631 = sbr.rel (%p629) target = $region94
      $region93: #{tpu_custom_call.1} parent=5 // pred_region
        %s632 = ssub.s32 %s11, 2
      $region94: #{tpu_custom_call.1} parent=5 // pred_fallthru
        _
    $region6: #{tpu_custom_call.1} parent=1 // loop_footer
      %s15 = sadd.s32 1, %s11
    $region7: #{tpu_custom_call.1} parent=1 // loop_footer_branch
      %10 = sbr.rel target = $region3
    $region8: #{tpu_custom_call.1} parent=1 // loop_exit
      _
    %633 = vsyncpa [#allocation8], 1
    %s634 = scalar_lea.sflag [#allocation8], 1
    %635 = vsyncpa %s634, 1

</llo_original>
